<compile_context>
chip_gen: v7x
topology: tpu7x:2x2x1
jax: 0.10.0
libtpu: 0.0.40
codegen_flags: <defaults>
</compile_context>

<pallas_src>
import functools

import jax
import jax.numpy as jnp
from jax.experimental import pallas as pl
from jax.experimental.pallas import tpu as pltpu


# ---------------------------------------------------------------------------
# Pallas kernel
# ---------------------------------------------------------------------------
def _kernelnet_kernel(n_layers, s_ref, *refs):
    """refs = (w0, b0, w1, b1, ..., w_last, b_last, out_ref).

    s_ref is the lane-dense (1, TN) slab of S = |r_ij| / h.
    Weights w_k are stored (out, in); biases (out, 1).  Each layer computes
    w @ a + b (same math as torch.nn.Linear applied to column-major activations).
    """
    out_ref = refs[-1]
    wb_refs = refs[:-1]

    S = s_ref[...].astype(jnp.float32)                        # (1, TN)

    a = S
    for li in range(n_layers):
        w = wb_refs[2 * li][...].astype(jnp.float32)          # (out, in)
        b = wb_refs[2 * li + 1][...].astype(jnp.float32)      # (out, 1)
        in_dim = w.shape[1]
        if in_dim == 1:
            # (out,1) * (1,TN) + (out,1) -> pure VPU broadcasts (no MXU needed)
            a = w * a + b
        else:
            # (out,in) @ (in,TN): MXU with the lane-wide TN output axis
            a = jnp.dot(w, a, preferred_element_type=jnp.float32) + b
        if li != n_layers - 1:
            # SiLU via tanh: x*sigmoid(x) == x*(0.5 + 0.5*tanh(0.5*x)).
            # Single EUP transcendental per element; no overflow for large |x|.
            a = a * (0.5 * jnp.tanh(0.5 * a) + 0.5)

    W = jnp.exp(a) * (1.0 - S * S)                            # (1, TN)
    out_ref[...] = W.astype(out_ref.dtype)


# ---------------------------------------------------------------------------
# Wrapper
# ---------------------------------------------------------------------------
def kernelnet_forward(r_ij, params, h, *, tile_n=8192):
    """r_ij: (..., D). params: list of (w, b) with w (in, out), b (1, out).

    Returns W with shape (..., 1), matching the PyTorch module.
    """
    orig_lead = r_ij.shape[:-1]
    D = r_ij.shape[-1]
    r_flat = r_ij.reshape(-1, D).astype(jnp.float32)
    N = r_flat.shape[0]

    # S = |r| / h computed with plain XLA (cheap reduce over tiny D); the kernel
    # only sees the lane-dense slab -> 1/3 of the input DMA vs. shipping r_ij.
    S = jnp.sqrt(jnp.sum(r_flat * r_flat, axis=-1)) * (1.0 / h)   # (N,)

    # Lane-align and pad N so the grid is exact.
    n_lane = max(128, ((N + 127) // 128) * 128)
    tile_n = min(tile_n, n_lane)
    # Prefer >= 2 grid steps so v7x can shard the "parallel" axis over both
    # TensorCores (per-step overhead is tiny compared to the 2x core win).
    if n_lane >= 256:
        half = ((n_lane // 2 + 127) // 128) * 128
        tile_n = min(tile_n, max(128, half))
    n_padded = ((N + tile_n - 1) // tile_n) * tile_n

    # Zero-pad the tail lanes (S = 0 there; results on those lanes are discarded).
    S_pad = jnp.zeros((1, n_padded), jnp.float32).at[0, :N].set(S)

    n_layers = len(params)
    flat_wb = []
    in_specs = [pl.BlockSpec((1, tile_n), lambda i: (0, i))]
    for (w, b) in params:
        wt = jnp.asarray(w, jnp.float32).T                 # (out, in)
        bt = jnp.asarray(b, jnp.float32).reshape(-1, 1)    # (out, 1)
        flat_wb.append(wt)
        flat_wb.append(bt)
        # Tiny weights: full-array blocks, constant index -> resident in VMEM.
        in_specs.append(pl.BlockSpec(wt.shape, lambda i: (0, 0)))
        in_specs.append(pl.BlockSpec(bt.shape, lambda i: (0, 0)))

    kernel = functools.partial(_kernelnet_kernel, n_layers)

    out = pl.pallas_call(
        kernel,
        out_shape=jax.ShapeDtypeStruct((1, n_padded), jnp.float32),
        grid_spec=pltpu.PrefetchScalarGridSpec(
            num_scalar_prefetch=0,
            grid=(n_padded // tile_n,),
            in_specs=in_specs,
            out_specs=pl.BlockSpec((1, tile_n), lambda i: (0, i)),
        ),
        compiler_params=pltpu.CompilerParams(
            dimension_semantics=("parallel",),
            # Even at tile_n=8192 the live (32, TN) f32 activations are ~1 MiB
            # plus small double-buffered (1, TN) input/output blocks -- well
            # under the 32 MiB scoped VMEM on v5e/v6e/v7x.
            vmem_limit_bytes=32 * 1024 * 1024,
        ),
    )(S_pad, *flat_wb)

    # Back to the PyTorch layout: (..., 1)
    return out[0, :N].reshape(orig_lead + (1,))


# ---------------------------------------------------------------------------
# Deterministic parameter construction (matches MLP([1] + n_hidden*[H] + [1]))
# ---------------------------------------------------------------------------
def make_params(key, dim_hidden, n_hidden):
    layer_vec = [1] + n_hidden * [dim_hidden] + [1]
    params = []
    for k in range(len(layer_vec) - 1):
        fan_in, fan_out = layer_vec[k], layer_vec[k + 1]
        key, kw, kb = jax.random.split(key, 3)
        bound = 1.0 / jnp.sqrt(fan_in)
        # stored as (in, out): reference does x @ w + b
        w = jax.random.uniform(kw, (fan_in, fan_out), jnp.float32, -bound, bound)
        b = jax.random.uniform(kb, (1, fan_out), jnp.float32, -bound, bound)
        params.append((w, b))
    return params


# Pure-JAX reference for a correctness check.
def kernelnet_ref(r_ij, params, h):
    r = jnp.sqrt(jnp.sum(r_ij * r_ij, axis=-1, keepdims=True))
    S = r / h
    a = S
    for li, (w, b) in enumerate(params):
        a = a @ w + b
        if li != len(params) - 1:
            a = a * jax.nn.sigmoid(a)
    return jnp.exp(a) * (1.0 - S ** 2)


# ---------------------------------------------------------------------------
if __name__ == "__main__":
    dim_hidden = 32
    n_hidden = 2
    h = 1.5

    N, D = 256, 3  # 256 pair vectors, 3-D displacement vectors

    key = jax.random.PRNGKey(0)
    key, k_in = jax.random.split(key)
    r_ij = jax.random.normal(k_in, (N, D), dtype=jnp.float32)

    params = make_params(key, dim_hidden, n_hidden)

    out = kernelnet_forward(r_ij, params, h)
    out = jax.block_until_ready(out)

    ref = kernelnet_ref(r_ij, params, h)
    assert out.shape == (N, 1)
    assert jnp.allclose(out, ref, rtol=1e-4, atol=1e-5), "mismatch vs reference"

    print("KERNEL_OK")
</pallas_src>

<mosaic_0001>
module attributes {stable_mosaic.version = 11 : i64} {
  func.func @_kernelnet_kernel(%arg0: i32, %arg1: memref<1x128xf32, #tpu.memory_space<vmem>>, %arg2: memref<32x1xf32, #tpu.memory_space<vmem>>, %arg3: memref<32x1xf32, #tpu.memory_space<vmem>>, %arg4: memref<32x32xf32, #tpu.memory_space<vmem>>, %arg5: memref<32x1xf32, #tpu.memory_space<vmem>>, %arg6: memref<1x32xf32, #tpu.memory_space<vmem>>, %arg7: memref<1x1xf32, #tpu.memory_space<vmem>>, %arg8: memref<1x128xf32, #tpu.memory_space<vmem>>) attributes {dimension_semantics = [#tpu.dimension_semantics<parallel>], iteration_bounds = array<i64: 2>, scalar_prefetch = 0 : i64, scratch_operands = 0 : i64, tpu.core_type = #tpu.core_type<tc>, window_params = [{transform_indices = @transform_0, window_bounds = array<i64: 1, 128>}, {pipeline_mode = #tpu.pipeline_mode<synchronous>, transform_indices = @transform_1, window_bounds = array<i64: 32, 1>}, {pipeline_mode = #tpu.pipeline_mode<synchronous>, transform_indices = @transform_2, window_bounds = array<i64: 32, 1>}, {pipeline_mode = #tpu.pipeline_mode<synchronous>, transform_indices = @transform_3, window_bounds = array<i64: 32, 32>}, {pipeline_mode = #tpu.pipeline_mode<synchronous>, transform_indices = @transform_4, window_bounds = array<i64: 32, 1>}, {pipeline_mode = #tpu.pipeline_mode<synchronous>, transform_indices = @transform_5, window_bounds = array<i64: 1, 32>}, {pipeline_mode = #tpu.pipeline_mode<synchronous>, transform_indices = @transform_6, window_bounds = array<i64: 1, 1>}, {transform_indices = @transform_7, window_bounds = array<i64: 1, 128>}]} {
    %c0 = arith.constant 0 : index
    %c0_0 = arith.constant 0 : index
    %0 = vector.load %arg1[%c0, %c0_0] : memref<1x128xf32, #tpu.memory_space<vmem>>, vector<1x128xf32>
    %c0_1 = arith.constant 0 : index
    %c0_2 = arith.constant 0 : index
    %1 = vector.load %arg2[%c0_1, %c0_2] : memref<32x1xf32, #tpu.memory_space<vmem>>, vector<32x1xf32>
    %c0_3 = arith.constant 0 : index
    %c0_4 = arith.constant 0 : index
    %2 = vector.load %arg3[%c0_3, %c0_4] : memref<32x1xf32, #tpu.memory_space<vmem>>, vector<32x1xf32>
    %3 = vector.broadcast %1 : vector<32x1xf32> to vector<32x128xf32>
    %4 = vector.broadcast %0 : vector<1x128xf32> to vector<32x128xf32>
    %5 = arith.mulf %3, %4 : vector<32x128xf32>
    %6 = vector.broadcast %2 : vector<32x1xf32> to vector<32x128xf32>
    %7 = arith.addf %5, %6 : vector<32x128xf32>
    %cst = arith.constant 5.000000e-01 : f32
    %8 = vector.broadcast %cst : f32 to vector<32x128xf32>
    %9 = arith.mulf %8, %7 : vector<32x128xf32>
    %10 = math.tanh %9 : vector<32x128xf32>
    %cst_5 = arith.constant 5.000000e-01 : f32
    %11 = vector.broadcast %cst_5 : f32 to vector<32x128xf32>
    %12 = arith.mulf %11, %10 : vector<32x128xf32>
    %cst_6 = arith.constant 5.000000e-01 : f32
    %13 = vector.broadcast %cst_6 : f32 to vector<32x128xf32>
    %14 = arith.addf %12, %13 : vector<32x128xf32>
    %15 = arith.mulf %7, %14 : vector<32x128xf32>
    %c0_7 = arith.constant 0 : index
    %c0_8 = arith.constant 0 : index
    %16 = vector.load %arg4[%c0_7, %c0_8] : memref<32x32xf32, #tpu.memory_space<vmem>>, vector<32x32xf32>
    %c0_9 = arith.constant 0 : index
    %c0_10 = arith.constant 0 : index
    %17 = vector.load %arg5[%c0_9, %c0_10] : memref<32x1xf32, #tpu.memory_space<vmem>>, vector<32x1xf32>
    %cst_11 = arith.constant dense<0.000000e+00> : vector<32x128xf32>
    %18 = tpu.matmul %16, %15, %cst_11 {dimension_numbers = #tpu.dot_dimension_numbers<[1], [0], [0], [1], [0, 0, 1, 1], [], []>} : vector<32x32xf32>, vector<32x128xf32>, vector<32x128xf32> -> vector<32x128xf32>
    %19 = vector.broadcast %17 : vector<32x1xf32> to vector<32x128xf32>
    %20 = arith.addf %18, %19 : vector<32x128xf32>
    %cst_12 = arith.constant 5.000000e-01 : f32
    %21 = vector.broadcast %cst_12 : f32 to vector<32x128xf32>
    %22 = arith.mulf %21, %20 : vector<32x128xf32>
    %23 = math.tanh %22 : vector<32x128xf32>
    %cst_13 = arith.constant 5.000000e-01 : f32
    %24 = vector.broadcast %cst_13 : f32 to vector<32x128xf32>
    %25 = arith.mulf %24, %23 : vector<32x128xf32>
    %cst_14 = arith.constant 5.000000e-01 : f32
    %26 = vector.broadcast %cst_14 : f32 to vector<32x128xf32>
    %27 = arith.addf %25, %26 : vector<32x128xf32>
    %28 = arith.mulf %20, %27 : vector<32x128xf32>
    %c0_15 = arith.constant 0 : index
    %c0_16 = arith.constant 0 : index
    %29 = vector.load %arg6[%c0_15, %c0_16] : memref<1x32xf32, #tpu.memory_space<vmem>>, vector<1x32xf32>
    %c0_17 = arith.constant 0 : index
    %c0_18 = arith.constant 0 : index
    %30 = vector.load %arg7[%c0_17, %c0_18] : memref<1x1xf32, #tpu.memory_space<vmem>>, vector<1x1xf32>
    %cst_19 = arith.constant dense<0.000000e+00> : vector<1x128xf32>
    %31 = tpu.matmul %29, %28, %cst_19 {dimension_numbers = #tpu.dot_dimension_numbers<[1], [0], [0], [1], [0, 0, 1, 1], [], []>} : vector<1x32xf32>, vector<32x128xf32>, vector<1x128xf32> -> vector<1x128xf32>
    %32 = vector.broadcast %30 : vector<1x1xf32> to vector<1x128xf32>
    %33 = arith.addf %31, %32 : vector<1x128xf32>
    %34 = math.exp %33 : vector<1x128xf32>
    %35 = arith.mulf %0, %0 : vector<1x128xf32>
    %cst_20 = arith.constant 1.000000e+00 : f32
    %36 = vector.broadcast %cst_20 : f32 to vector<1x128xf32>
    %37 = arith.subf %36, %35 : vector<1x128xf32>
    %38 = arith.mulf %34, %37 : vector<1x128xf32>
    %c0_21 = arith.constant 0 : index
    %c0_22 = arith.constant 0 : index
    %39 = vector.load %arg8[%c0_21, %c0_22] : memref<1x128xf32, #tpu.memory_space<vmem>>, vector<1x128xf32>
    tpu.vector_store %arg8[%c0_21, %c0_22], %38 {strides = array<i32>} : memref<1x128xf32, #tpu.memory_space<vmem>>, vector<1x128xf32>,
    return
  }
  func.func @transform_0(%arg0: i32) -> (i32, i32) {
    %c0_i32 = arith.constant 0 : i32
    %c0_i32_0 = arith.constant 0 : i32
    return %c0_i32, %arg0 : i32, i32
  }
  func.func @transform_1(%arg0: i32) -> (i32, i32) {
    %c0_i32 = arith.constant 0 : i32
    %c0_i32_0 = arith.constant 0 : i32
    %c0_i32_1 = arith.constant 0 : i32
    return %c0_i32, %c0_i32_0 : i32, i32
  }
  func.func @transform_2(%arg0: i32) -> (i32, i32) {
    %c0_i32 = arith.constant 0 : i32
    %c0_i32_0 = arith.constant 0 : i32
    %c0_i32_1 = arith.constant 0 : i32
    return %c0_i32, %c0_i32_0 : i32, i32
  }
  func.func @transform_3(%arg0: i32) -> (i32, i32) {
    %c0_i32 = arith.constant 0 : i32
    %c0_i32_0 = arith.constant 0 : i32
    %c0_i32_1 = arith.constant 0 : i32
    return %c0_i32, %c0_i32_0 : i32, i32
  }
  func.func @transform_4(%arg0: i32) -> (i32, i32) {
    %c0_i32 = arith.constant 0 : i32
    %c0_i32_0 = arith.constant 0 : i32
    %c0_i32_1 = arith.constant 0 : i32
    return %c0_i32, %c0_i32_0 : i32, i32
  }
  func.func @transform_5(%arg0: i32) -> (i32, i32) {
    %c0_i32 = arith.constant 0 : i32
    %c0_i32_0 = arith.constant 0 : i32
    %c0_i32_1 = arith.constant 0 : i32
    return %c0_i32, %c0_i32_0 : i32, i32
  }
  func.func @transform_6(%arg0: i32) -> (i32, i32) {
    %c0_i32 = arith.constant 0 : i32
    %c0_i32_0 = arith.constant 0 : i32
    %c0_i32_1 = arith.constant 0 : i32
    return %c0_i32, %c0_i32_0 : i32, i32
  }
  func.func @transform_7(%arg0: i32) -> (i32, i32) {
    %c0_i32 = arith.constant 0 : i32
    %c0_i32_0 = arith.constant 0 : i32
    return %c0_i32, %arg0 : i32, i32
  }
}

</mosaic_0001>

<llo_original>
// kernel: tpu_custom_call.1
$region0: #{tpu_custom_call.1}
  #allocation0 [shape = 'u32[]', space=smem, size = 0x4, offset = 0x4, fixed_abs, tag = 'smem constant byte address 0x4 - core index']
  #allocation1 [shape = 'u32[144,128]{1,0:T(1,128)}', space=vmem, size = 0x12000, scoped, tag = 'internal scratch']
  #allocation2 [shape = 'f32[1,1]{1,0:T(1,128)S(1)}', space=vmem, size = 0x200, scoped, tag = 'scoped memory for tpu_custom_call.1']
  %s0 = inlined_call_operand.vmem [shape: f32[1,256], index: 0, kind: input, shape index: {}]
  %s1 = inlined_call_operand.vmem [shape: f32[32,1], index: 1, kind: input, shape index: {}]
  %s2 = inlined_call_operand.vmem [shape: f32[32,1], index: 2, kind: input, shape index: {}]
  %s3 = inlined_call_operand.vmem [shape: f32[32,32], index: 3, kind: input, shape index: {}]
  %s4 = inlined_call_operand.vmem [shape: f32[32,1], index: 4, kind: input, shape index: {}]
  %s5 = inlined_call_operand.vmem [shape: f32[1,32], index: 5, kind: input, shape index: {}]
  %s6 = inlined_call_operand.<no memory space> [shape: f32[1,1], index: 6, kind: input, shape index: {}]
  %s7 = inlined_call_operand.hbm [shape: f32[1,256], index: 7, kind: output, shape index: {}]
  %s8 = sld [smem:[#allocation0]]
  $region61: #{tpu_custom_call.1} parent=0
    _
  %s10 = ssub.s32 1, %s8
  %s11 = scalar_select 0, %s10, %s8
  %v12 = vstv %s6
  %13 = vst [vmem:[#allocation2] sm:$0x1] %v12
  $region1: #{tpu_custom_call.1} parent=0
    #allocation3 [shape = 'u8[1024]{0}', space=vmem, size = 0x400, scoped, tag = 'output window, operand 0']
    #allocation4 [shape = 's32[2]{0}', space=sflag, size = 0x8, scoped, tag = 'scoped memory for tpu_custom_call.1']
    %14 = vsyncpa [#allocation4], 0
    %s15 = scalar_lea.sflag [#allocation4], 1
    %16 = vsyncpa %s15, 0
    loop: start=0, step=1, limit=4
    $region2: #{tpu_custom_call.1} parent=1 // loop_pre_header
      _
    $region3: #{tpu_custom_call.1} parent=1 // loop_header
      %s18 = sphi 0, %s22
      %p19 = scmp.ge.s32.totalorder %s18, 4
      %s28 = sphi 0, %s30
      %s31 = sphi 0, %s28
      %s32 = sphi 0, %s31
      %s48 = sphi 0, %s32
      %s52 = sphi 0, %s52
      %s54 = sphi 0, %s52
      %s55 = sphi 0, %s54
      %s69 = sphi 0, %s55
      %s73 = sphi 0, %s73
      %s75 = sphi 0, %s73
      %s76 = sphi 0, %s75
      %s90 = sphi 0, %s76
      %s94 = sphi 0, %s94
      %s96 = sphi 0, %s94
      %s97 = sphi 0, %s96
      %s111 = sphi 0, %s97
      %s115 = sphi 0, %s115
      %s117 = sphi 0, %s115
      %s118 = sphi 0, %s117
      %s132 = sphi 0, %s118
      %s136 = sphi 0, %s136
      %s138 = sphi 0, %s136
      %s139 = sphi 0, %s138
      %s153 = sphi 0, %s139
      %s157 = sphi 0, %s157
      %s159 = sphi 0, %s157
      %s160 = sphi 0, %s159
      %s174 = sphi 0, %s160
      %s180 = sphi 0, %s182
      %s183 = sphi 0, %s180
      %s184 = sphi 0, %s183
      %s200 = sphi 0, %s184
    $region4: #{tpu_custom_call.1} parent=1 // loop_header_branch
      %21 = sbr.rel (%p19) target = $region8
    $region5: #{tpu_custom_call.1} parent=1 // loop_body
      %s23 = ssub.s32 %s18, 1
      %s24 = ssub.s32 %s18, 2
      %s25 = sadd.s32 %s18, 1
      %s26 = ssub.s32 %s18, %s25
      %p27 = scmp.eq.s32.totalorder %s26, 0
      %s29 = sadd.s32 %s28, 1
      %s30 = scalar_select %p27, %s28, %s29
      %p33 = pneg %p27
      %p34 = scmp.eq.s32.totalorder %s18, 1
      %p35 = por %p33, %p34
      %p36 = scmp.ne.s32.totalorder %s28, %s31
      %p37 = scmp.eq.s32.totalorder %s18, 0
      %p38 = por %p36, %p37
      %p39 = scmp.ne.s32.totalorder %s28, %s31
      %p40 = scmp.eq.s32.totalorder %s23, 1
      %p41 = por %p39, %p40
      %p42 = scmp.ne.s32.totalorder %s31, %s32
      %p43 = scmp.eq.s32.totalorder %s23, 0
      %p44 = por %p42, %p43
      %p45 = scmp.ne.s32.totalorder %s31, %s32
      %p46 = scmp.eq.s32.totalorder %s24, 1
      %p47 = por %p45, %p46
      %p49 = scmp.ne.s32.totalorder %s32, %s48
      %p50 = scmp.eq.s32.totalorder %s24, 0
      %p51 = por %p49, %p50
      %s53 = sadd.s32 %s52, 1
      %p56 = scmp.eq.s32.totalorder %s18, 1
      %p57 = scmp.ne.s32.totalorder %s52, %s54
      %p58 = scmp.eq.s32.totalorder %s18, 0
      %p59 = por %p57, %p58
      %p60 = scmp.ne.s32.totalorder %s52, %s54
      %p61 = scmp.eq.s32.totalorder %s23, 1
      %p62 = por %p60, %p61
      %p63 = scmp.ne.s32.totalorder %s54, %s55
      %p64 = scmp.eq.s32.totalorder %s23, 0
      %p65 = por %p63, %p64
      %p66 = scmp.ne.s32.totalorder %s54, %s55
      %p67 = scmp.eq.s32.totalorder %s24, 1
      %p68 = por %p66, %p67
      %p70 = scmp.ne.s32.totalorder %s55, %s69
      %p71 = scmp.eq.s32.totalorder %s24, 0
      %p72 = por %p70, %p71
      %s74 = sadd.s32 %s73, 1
      %p77 = scmp.eq.s32.totalorder %s18, 1
      %p78 = scmp.ne.s32.totalorder %s73, %s75
      %p79 = scmp.eq.s32.totalorder %s18, 0
      %p80 = por %p78, %p79
      %p81 = scmp.ne.s32.totalorder %s73, %s75
      %p82 = scmp.eq.s32.totalorder %s23, 1
      %p83 = por %p81, %p82
      %p84 = scmp.ne.s32.totalorder %s75, %s76
      %p85 = scmp.eq.s32.totalorder %s23, 0
      %p86 = por %p84, %p85
      %p87 = scmp.ne.s32.totalorder %s75, %s76
      %p88 = scmp.eq.s32.totalorder %s24, 1
      %p89 = por %p87, %p88
      %p91 = scmp.ne.s32.totalorder %s76, %s90
      %p92 = scmp.eq.s32.totalorder %s24, 0
      %p93 = por %p91, %p92
      %s95 = sadd.s32 %s94, 1
      %p98 = scmp.eq.s32.totalorder %s18, 1
      %p99 = scmp.ne.s32.totalorder %s94, %s96
      %p100 = scmp.eq.s32.totalorder %s18, 0
      %p101 = por %p99, %p100
      %p102 = scmp.ne.s32.totalorder %s94, %s96
      %p103 = scmp.eq.s32.totalorder %s23, 1
      %p104 = por %p102, %p103
      %p105 = scmp.ne.s32.totalorder %s96, %s97
      %p106 = scmp.eq.s32.totalorder %s23, 0
      %p107 = por %p105, %p106
      %p108 = scmp.ne.s32.totalorder %s96, %s97
      %p109 = scmp.eq.s32.totalorder %s24, 1
      %p110 = por %p108, %p109
      %p112 = scmp.ne.s32.totalorder %s97, %s111
      %p113 = scmp.eq.s32.totalorder %s24, 0
      %p114 = por %p112, %p113
      %s116 = sadd.s32 %s115, 1
      %p119 = scmp.eq.s32.totalorder %s18, 1
      %p120 = scmp.ne.s32.totalorder %s115, %s117
      %p121 = scmp.eq.s32.totalorder %s18, 0
      %p122 = por %p120, %p121
      %p123 = scmp.ne.s32.totalorder %s115, %s117
      %p124 = scmp.eq.s32.totalorder %s23, 1
      %p125 = por %p123, %p124
      %p126 = scmp.ne.s32.totalorder %s117, %s118
      %p127 = scmp.eq.s32.totalorder %s23, 0
      %p128 = por %p126, %p127
      %p129 = scmp.ne.s32.totalorder %s117, %s118
      %p130 = scmp.eq.s32.totalorder %s24, 1
      %p131 = por %p129, %p130
      %p133 = scmp.ne.s32.totalorder %s118, %s132
      %p134 = scmp.eq.s32.totalorder %s24, 0
      %p135 = por %p133, %p134
      %s137 = sadd.s32 %s136, 1
      %p140 = scmp.eq.s32.totalorder %s18, 1
      %p141 = scmp.ne.s32.totalorder %s136, %s138
      %p142 = scmp.eq.s32.totalorder %s18, 0
      %p143 = por %p141, %p142
      %p144 = scmp.ne.s32.totalorder %s136, %s138
      %p145 = scmp.eq.s32.totalorder %s23, 1
      %p146 = por %p144, %p145
      %p147 = scmp.ne.s32.totalorder %s138, %s139
      %p148 = scmp.eq.s32.totalorder %s23, 0
      %p149 = por %p147, %p148
      %p150 = scmp.ne.s32.totalorder %s138, %s139
      %p151 = scmp.eq.s32.totalorder %s24, 1
      %p152 = por %p150, %p151
      %p154 = scmp.ne.s32.totalorder %s139, %s153
      %p155 = scmp.eq.s32.totalorder %s24, 0
      %p156 = por %p154, %p155
      %s158 = sadd.s32 %s157, 1
      %p161 = scmp.eq.s32.totalorder %s18, 1
      %p162 = scmp.ne.s32.totalorder %s157, %s159
      %p163 = scmp.eq.s32.totalorder %s18, 0
      %p164 = por %p162, %p163
      %p165 = scmp.ne.s32.totalorder %s157, %s159
      %p166 = scmp.eq.s32.totalorder %s23, 1
      %p167 = por %p165, %p166
      %p168 = scmp.ne.s32.totalorder %s159, %s160
      %p169 = scmp.eq.s32.totalorder %s23, 0
      %p170 = por %p168, %p169
      %p171 = scmp.ne.s32.totalorder %s159, %s160
      %p172 = scmp.eq.s32.totalorder %s24, 1
      %p173 = por %p171, %p172
      %p175 = scmp.ne.s32.totalorder %s160, %s174
      %p176 = scmp.eq.s32.totalorder %s24, 0
      %p177 = por %p175, %p176
      %s178 = ssub.s32 %s18, %s25
      %p179 = scmp.eq.s32.totalorder %s178, 0
      %s181 = sadd.s32 %s180, 1
      %s182 = scalar_select %p179, %s180, %s181
      %p185 = pneg %p179
      %p186 = scmp.eq.s32.totalorder %s18, 1
      %p187 = por %p185, %p186
      %p188 = scmp.ne.s32.totalorder %s180, %s183
      %p189 = scmp.eq.s32.totalorder %s18, 0
      %p190 = por %p188, %p189
      %p191 = scmp.ne.s32.totalorder %s180, %s183
      %p192 = scmp.eq.s32.totalorder %s23, 1
      %p193 = por %p191, %p192
      %p194 = scmp.ne.s32.totalorder %s183, %s184
      %p195 = scmp.eq.s32.totalorder %s23, 0
      %p196 = por %p194, %p195
      %p197 = scmp.ne.s32.totalorder %s183, %s184
      %p198 = scmp.eq.s32.totalorder %s24, 1
      %p199 = por %p197, %p198
      %p201 = scmp.ne.s32.totalorder %s184, %s200
      %p202 = scmp.eq.s32.totalorder %s24, 0
      %p203 = por %p201, %p202
      %p204 = scmp.le.s32.totalorder 1, %s18
      %p205 = scmp.lt.s32.totalorder %s18, 3
      %p206 = pnand %p204, %p205
      %p207 = pneg %p206
      // Predicated region
      $region9: #{tpu_custom_call.1} parent=5 // pred_check
        _
      $region10: #{tpu_custom_call.1} parent=5 // pred_check_branch
        %209 = sbr.rel (%p206) target = $region12
      $region11: #{tpu_custom_call.1} parent=5 // pred_region
        %s210 = ssub.s32 %s18, 1
        // Predicated region
        $region13: #{tpu_custom_call.1} parent=11 // pred_check
          %p211 = pneg %p65
        $region14: #{tpu_custom_call.1} parent=11 // pred_check_branch
          %213 = sbr.rel (%p211) target = $region16
        $region15: #{tpu_custom_call.1} parent=11 // pred_region
          _
        $region16: #{tpu_custom_call.1} parent=11 // pred_fallthru
          _
        // Predicated region
        $region17: #{tpu_custom_call.1} parent=11 // pred_check
          %p214 = pneg %p86
        $region18: #{tpu_custom_call.1} parent=11 // pred_check_branch
          %216 = sbr.rel (%p214) target = $region20
        $region19: #{tpu_custom_call.1} parent=11 // pred_region
          _
        $region20: #{tpu_custom_call.1} parent=11 // pred_fallthru
          _
        // Predicated region
        $region21: #{tpu_custom_call.1} parent=11 // pred_check
          %p217 = pneg %p107
        $region22: #{tpu_custom_call.1} parent=11 // pred_check_branch
          %219 = sbr.rel (%p217) target = $region24
        $region23: #{tpu_custom_call.1} parent=11 // pred_region
          _
        $region24: #{tpu_custom_call.1} parent=11 // pred_fallthru
          _
        // Predicated region
        $region25: #{tpu_custom_call.1} parent=11 // pred_check
          %p220 = pneg %p128
        $region26: #{tpu_custom_call.1} parent=11 // pred_check_branch
          %222 = sbr.rel (%p220) target = $region28
        $region27: #{tpu_custom_call.1} parent=11 // pred_region
          _
        $region28: #{tpu_custom_call.1} parent=11 // pred_fallthru
          _
        // Predicated region
        $region29: #{tpu_custom_call.1} parent=11 // pred_check
          %p223 = pneg %p149
        $region30: #{tpu_custom_call.1} parent=11 // pred_check_branch
          %225 = sbr.rel (%p223) target = $region32
        $region31: #{tpu_custom_call.1} parent=11 // pred_region
          _
        $region32: #{tpu_custom_call.1} parent=11 // pred_fallthru
          _
        // Predicated region
        $region33: #{tpu_custom_call.1} parent=11 // pred_check
          %p226 = pneg %p170
        $region34: #{tpu_custom_call.1} parent=11 // pred_check_branch
          %228 = sbr.rel (%p226) target = $region36
        $region35: #{tpu_custom_call.1} parent=11 // pred_region
          _
        $region36: #{tpu_custom_call.1} parent=11 // pred_fallthru
          _
      $region12: #{tpu_custom_call.1} parent=5 // pred_fallthru
        _
      %p229 = scmp.lt.s32.totalorder %s18, 2
      // Predicated region
      $region37: #{tpu_custom_call.1} parent=5 // pred_check
        %p230 = pneg %p229
      $region38: #{tpu_custom_call.1} parent=5 // pred_check_branch
        %232 = sbr.rel (%p230) target = $region40
      $region39: #{tpu_custom_call.1} parent=5 // pred_region
        // Predicated region
        $region41: #{tpu_custom_call.1} parent=39 // pred_check
          %p233 = pneg %p38
        $region42: #{tpu_custom_call.1} parent=39 // pred_check_branch
          %235 = sbr.rel (%p233) target = $region44
        $region43: #{tpu_custom_call.1} parent=39 // pred_region
          %p236 = scmp.lt.s32.totalorder %s18, 1
          %s237 = scalar_select %p236, %s18, 1
          %s238 = scalar_lea.vmem %s0, %s237
        $region44: #{tpu_custom_call.1} parent=39 // pred_fallthru
          _
      $region40: #{tpu_custom_call.1} parent=5 // pred_fallthru
        _
      %p239 = scmp.le.s32.totalorder 1, %s18
      %p240 = scmp.lt.s32.totalorder %s18, 3
      %p241 = pnand %p239, %p240
      %p242 = pneg %p241
      // Predicated region
      $region45: #{tpu_custom_call.1} parent=5 // pred_check
        _
      $region46: #{tpu_custom_call.1} parent=5 // pred_check_branch
        %244 = sbr.rel (%p241) target = $region48
      $region47: #{tpu_custom_call.1} parent=5 // pred_region
        %s245 = ssub.s32 %s18, 1
        %p246 = scmp.lt.s32.totalorder %s23, 1
        %s247 = scalar_select %p246, %s23, 1
        %s248 = scalar_lea.vmem %s0, %s247
        %p249 = pneg %p44
        %p250 = pneg %p41
        %p251 = pneg %p65
        %p252 = pneg %p62
        %p253 = pneg %p86
        %p254 = pneg %p83
        %p255 = pneg %p107
        %p256 = pneg %p104
        %p257 = pneg %p128
        %p258 = pneg %p125
        %p259 = pneg %p149
        %p260 = pneg %p146
        %p261 = pneg %p170
        %p262 = pneg %p167
        %p263 = pneg %p196
        %p264 = pneg %p193
        %s265 = sand.u32 %s183, 1
        %s266 = scalar_lea.sflag [#allocation4], %s265
        %s267 = sand.u32 %s183, 1
        %s268 = scalar_lea.vmem [#allocation3], %s267
        %p269 = scmp.lt.s32.totalorder %s23, 1
        %s270 = scalar_select %p269, %s23, 1
        %s271 = scalar_lea.vmem %s0, %s270
        %v272 = vld [vmem:[%s271] sm:$0x1]
        %v273 = vld [vmem:[%s1] sm:$0xff]
        %v274 = vld [vmem:[%s1 + $0x8] sm:$0xff]
        %v275 = vld [vmem:[%s1 + $0x10] sm:$0xff]
        %v276 = vld [vmem:[%s1 + $0x18] sm:$0xff]
        %v277 = vld [vmem:[%s2] sm:$0xff]
        %v278 = vld [vmem:[%s2 + $0x8] sm:$0xff]
        %v279 = vld [vmem:[%s2 + $0x10] sm:$0xff]
        %v280 = vld [vmem:[%s2 + $0x18] sm:$0xff]
        %282 = vset.pattern.permute.xlu0 0
        %283 = vperm.xlu0 %282, %v273
        %v284 = vpop.permute.xlu0 %283
        %287 = vset.pattern.permute.xlu0 0
        %288 = vperm.xlu0 %287, %v274
        %v289 = vpop.permute.xlu0 %288
        %292 = vset.pattern.permute.xlu0 0
        %293 = vperm.xlu0 %292, %v275
        %v294 = vpop.permute.xlu0 %293
        %297 = vset.pattern.permute.xlu0 0
        %298 = vperm.xlu0 %297, %v276
        %v299 = vpop.permute.xlu0 %298
        %v302 = vlaneseq
        %v303 = vshrl.u32 %v302, 7
        %v304 = vsub.s32 0, %v303
        %v305 = vrot.slane %v272, %v304
        %v307 = vmul.f32 %v284, %v305
        %v308 = vmul.f32 %v289, %v305
        %v309 = vmul.f32 %v294, %v305
        %v310 = vmul.f32 %v299, %v305
        %312 = vset.pattern.permute.xlu0 0
        %313 = vperm.xlu0 %312, %v277
        %v314 = vpop.permute.xlu0 %313
        %317 = vset.pattern.permute.xlu0 0
        %318 = vperm.xlu0 %317, %v278
        %v319 = vpop.permute.xlu0 %318
        %322 = vset.pattern.permute.xlu0 0
        %323 = vperm.xlu0 %322, %v279
        %v324 = vpop.permute.xlu0 %323
        %327 = vset.pattern.permute.xlu0 0
        %328 = vperm.xlu0 %327, %v280
        %v329 = vpop.permute.xlu0 %328
        %v331 = vadd.f32 %v307, %v314
        %v332 = vadd.f32 %v308, %v319
        %v333 = vadd.f32 %v309, %v324
        %v334 = vadd.f32 %v310, %v329
        %v335 = vmul.f32 %v331, 0.5
        %v336 = vmul.f32 %v332, 0.5
        %v337 = vmul.f32 %v333, 0.5
        %v338 = vmul.f32 %v334, 0.5
        %v339 = vtanh.pop %v335
        %v340 = vtanh.pop %v336
        %v341 = vtanh.pop %v337
        %v342 = vtanh.pop %v338
        %v343 = vmul.f32 %v339, 0.5
        %v344 = vmul.f32 %v340, 0.5
        %v345 = vmul.f32 %v341, 0.5
        %v346 = vmul.f32 %v342, 0.5
        %v347 = vadd.f32 %v343, 0.5
        %v348 = vadd.f32 %v344, 0.5
        %v349 = vadd.f32 %v345, 0.5
        %v350 = vadd.f32 %v346, 0.5
        %v351 = vmul.f32 %v331, %v347
        %v352 = vmul.f32 %v332, %v348
        %v353 = vmul.f32 %v333, %v349
        %v354 = vmul.f32 %v334, %v350
        %v355 = vld [vmem:[%s3] sm:$0xff]
        %v356 = vld [vmem:[%s3 + $0x8] sm:$0xff]
        %v357 = vld [vmem:[%s3 + $0x10] sm:$0xff]
        %v358 = vld [vmem:[%s3 + $0x18] sm:$0xff]
        %v359 = vld [vmem:[%s4] sm:$0xff]
        %v360 = vld [vmem:[%s4 + $0x8] sm:$0xff]
        %v361 = vld [vmem:[%s4 + $0x10] sm:$0xff]
        %v362 = vld [vmem:[%s4 + $0x18] sm:$0xff]
        %364 = vset.pattern.permute.xlu0 0
        %365 = vperm.xlu0 %364, %v359
        %v366 = vpop.permute.xlu0 %365
        %369 = vset.pattern.permute.xlu0 0
        %370 = vperm.xlu0 %369, %v360
        %v371 = vpop.permute.xlu0 %370
        %374 = vset.pattern.permute.xlu0 0
        %375 = vperm.xlu0 %374, %v361
        %v376 = vpop.permute.xlu0 %375
        %379 = vset.pattern.permute.xlu0 0
        %380 = vperm.xlu0 %379, %v362
        %v381 = vpop.permute.xlu0 %380
        %vm383 = vcmask 261120
        %v385 = vsel %vm383, %v355, 0
        %v388 = vsel %vm383, %v356, 0
        %v391 = vsel %vm383, %v357, 0
        %v394 = vsel %vm383, %v358, 0
        %396 = vmatprep.subr.mxu0 0.0
        %397 = vmatpush1.msra.mxu0 %v351
        %398 = vmatprep.subr.mxu0 0.0
        %399 = vmatpush1.msra.mxu0 %v352
        %400 = vmatprep.subr.mxu0 0.0
        %401 = vmatpush1.msra.mxu0 %v353
        %402 = vmatprep.subr.mxu0 0.0
        %403 = vmatpush1.msra.mxu0 %v354
        %404 = vmatprep.subr.mxu0 0.0
        %405 = vmatpush1.msra.mxu0 0.0
        %406 = vmatprep.subr.mxu0 0.0
        %407 = vmatpush1.msra.mxu0 0.0
        %408 = vmatprep.subr.mxu0 0.0
        %409 = vmatpush1.msra.mxu0 0.0
        %410 = vmatprep.subr.mxu0 0.0
        %411 = vmatpush1.msra.mxu0 0.0
        %412 = vmatprep.subr.mxu0 0.0
        %413 = vmatpush1.msra.mxu0 0.0
        %414 = vmatprep.subr.mxu0 0.0
        %415 = vmatpush1.msra.mxu0 0.0
        %416 = vmatprep.subr.mxu0 0.0
        %417 = vmatpush1.msra.mxu0 0.0
        %418 = vmatprep.subr.mxu0 0.0
        %419 = vmatpush1.msra.mxu0 0.0
        %420 = vmatprep.subr.mxu0 0.0
        %421 = vmatpush1.msra.mxu0 0.0
        %422 = vmatprep.subr.mxu0 0.0
        %423 = vmatpush1.msra.mxu0 0.0
        %424 = vmatprep.subr.mxu0 0.0
        %425 = vmatpush1.msra.mxu0 0.0
        %426 = vmatprep.subr.mxu0 0.0
        %427 = vmatpush1.msra.mxu0 0.0
        %428 = vmatprep.subr.mxu0 0.0
        %429 = vmatpush1.msra.mxu0 0.0
        %430 = vmatprep.subr.mxu0 0.0
        %431 = vmatpush1.msra.mxu0 0.0
        %432 = vmatprep.subr.mxu0 0.0
        %433 = vmatpush1.msra.mxu0 0.0
        %434 = vmatprep.subr.mxu0 0.0
        %435 = vmatpush1.msra.mxu0 0.0
        %436 = vmatprep.subr.mxu0 0.0
        %437 = vmatpush1.msra.mxu0 0.0
        %438 = vmatprep.subr.mxu0 0.0
        %439 = vmatpush1.msra.mxu0 0.0
        %440 = vmatprep.subr.mxu0 0.0
        %441 = vmatpush1.msra.mxu0 0.0
        %442 = vmatprep.subr.mxu0 0.0
        %443 = vmatpush1.msra.mxu0 0.0
        %444 = vmatprep.subr.mxu0 0.0
        %445 = vmatpush1.msra.mxu0 0.0
        %446 = vmatprep.subr.mxu0 0.0
        %447 = vmatpush1.msra.mxu0 0.0
        %448 = vmatprep.subr.mxu0 0.0
        %449 = vmatpush1.msra.mxu0 0.0
        %450 = vmatprep.subr.mxu0 0.0
        %451 = vmatpush1.msra.mxu0 0.0
        %452 = vmatprep.subr.mxu0 0.0
        %453 = vmatpush1.msra.mxu0 0.0
        %454 = vmatprep.subr.mxu0 0.0
        %455 = vmatpush1.msra.mxu0 0.0
        %456 = vmatprep.subr.mxu0 0.0
        %457 = vmatpush1.msra.mxu0 0.0
        %458 = vmatprep.subr.mxu0 0.0
        %459 = vmatpush1.msra.mxu0 0.0
        %460 = vmatprep.mubr.f32.mxu0 0.0
        %461 = vmatmul.mubr.f32.gmra.mrb[0].mxu0 %v385
        %v462 = vpop.f32.mrb[0].mxu0
        %v463 = vadd.f32 %v366, %v462
        %v464 = vpop.f32.mrb[0].mxu0
        %465 = vmatprep.mubr.f32.mxu0 0.0
        %466 = vmatmul.mubr.f32.gmra.mrb[0].mxu0 %v388
        %v467 = vpop.f32.mrb[0].mxu0
        %v468 = vadd.f32 %v371, %v467
        %v469 = vpop.f32.mrb[0].mxu0
        %470 = vmatprep.mubr.f32.mxu0 0.0
        %471 = vmatmul.mubr.f32.gmra.mrb[0].mxu0 %v391
        %v472 = vpop.f32.mrb[0].mxu0
        %v473 = vadd.f32 %v376, %v472
        %v474 = vpop.f32.mrb[0].mxu0
        %475 = vmatprep.mubr.f32.mxu0 0.0
        %476 = vmatmul.mubr.f32.gmra.mrb[0].mxu0 %v394
        %v477 = vpop.f32.mrb[0].mxu0
        %v478 = vadd.f32 %v381, %v477
        %v479 = vpop.f32.mrb[0].mxu0
        %480 = vdwg.mxu0
        %v481 = vmul.f32 %v463, 0.5
        %v482 = vmul.f32 %v468, 0.5
        %v483 = vmul.f32 %v473, 0.5
        %v484 = vmul.f32 %v478, 0.5
        %v485 = vtanh.pop %v481
        %v486 = vtanh.pop %v482
        %v487 = vtanh.pop %v483
        %v488 = vtanh.pop %v484
        %v489 = vmul.f32 %v485, 0.5
        %v490 = vmul.f32 %v486, 0.5
        %v491 = vmul.f32 %v487, 0.5
        %v492 = vmul.f32 %v488, 0.5
        %v493 = vadd.f32 %v489, 0.5
        %v494 = vadd.f32 %v490, 0.5
        %v495 = vadd.f32 %v491, 0.5
        %v496 = vadd.f32 %v492, 0.5
        %v497 = vmul.f32 %v463, %v493
        %v498 = vmul.f32 %v468, %v494
        %v499 = vmul.f32 %v473, %v495
        %v500 = vmul.f32 %v478, %v496
        %v501 = vld [vmem:[%s5] sm:$0x1]
        %v502 = vld [vmem:[#allocation2] sm:$0x1]
        %504 = vset.pattern.permute.xlu0 0
        %505 = vperm.xlu0 %504, %v502
        %v506 = vpop.permute.xlu0 %505
        %v508 = vlaneseq
        %v509 = vshrl.u32 %v508, 7
        %v510 = vsub.s32 0, %v509
        %v511 = vrot.slane %v506, %v510
        %v513 = vsel %vm383, %v501, 0
        %515 = vmatprep.subr.mxu0 0.0
        %516 = vmatpush1.msra.mxu0 %v497
        %517 = vmatprep.subr.mxu0 0.0
        %518 = vmatpush1.msra.mxu0 %v498
        %519 = vmatprep.subr.mxu0 0.0
        %520 = vmatpush1.msra.mxu0 %v499
        %521 = vmatprep.subr.mxu0 0.0
        %522 = vmatpush1.msra.mxu0 %v500
        %523 = vmatprep.subr.mxu0 0.0
        %524 = vmatpush1.msra.mxu0 0.0
        %525 = vmatprep.subr.mxu0 0.0
        %526 = vmatpush1.msra.mxu0 0.0
        %527 = vmatprep.subr.mxu0 0.0
        %528 = vmatpush1.msra.mxu0 0.0
        %529 = vmatprep.subr.mxu0 0.0
        %530 = vmatpush1.msra.mxu0 0.0
        %531 = vmatprep.subr.mxu0 0.0
        %532 = vmatpush1.msra.mxu0 0.0
        %533 = vmatprep.subr.mxu0 0.0
        %534 = vmatpush1.msra.mxu0 0.0
        %535 = vmatprep.subr.mxu0 0.0
        %536 = vmatpush1.msra.mxu0 0.0
        %537 = vmatprep.subr.mxu0 0.0
        %538 = vmatpush1.msra.mxu0 0.0
        %539 = vmatprep.subr.mxu0 0.0
        %540 = vmatpush1.msra.mxu0 0.0
        %541 = vmatprep.subr.mxu0 0.0
        %542 = vmatpush1.msra.mxu0 0.0
        %543 = vmatprep.subr.mxu0 0.0
        %544 = vmatpush1.msra.mxu0 0.0
        %545 = vmatprep.subr.mxu0 0.0
        %546 = vmatpush1.msra.mxu0 0.0
        %547 = vmatprep.subr.mxu0 0.0
        %548 = vmatpush1.msra.mxu0 0.0
        %549 = vmatprep.subr.mxu0 0.0
        %550 = vmatpush1.msra.mxu0 0.0
        %551 = vmatprep.subr.mxu0 0.0
        %552 = vmatpush1.msra.mxu0 0.0
        %553 = vmatprep.subr.mxu0 0.0
        %554 = vmatpush1.msra.mxu0 0.0
        %555 = vmatprep.subr.mxu0 0.0
        %556 = vmatpush1.msra.mxu0 0.0
        %557 = vmatprep.subr.mxu0 0.0
        %558 = vmatpush1.msra.mxu0 0.0
        %559 = vmatprep.subr.mxu0 0.0
        %560 = vmatpush1.msra.mxu0 0.0
        %561 = vmatprep.subr.mxu0 0.0
        %562 = vmatpush1.msra.mxu0 0.0
        %563 = vmatprep.subr.mxu0 0.0
        %564 = vmatpush1.msra.mxu0 0.0
        %565 = vmatprep.subr.mxu0 0.0
        %566 = vmatpush1.msra.mxu0 0.0
        %567 = vmatprep.subr.mxu0 0.0
        %568 = vmatpush1.msra.mxu0 0.0
        %569 = vmatprep.subr.mxu0 0.0
        %570 = vmatpush1.msra.mxu0 0.0
        %571 = vmatprep.subr.mxu0 0.0
        %572 = vmatpush1.msra.mxu0 0.0
        %573 = vmatprep.subr.mxu0 0.0
        %574 = vmatpush1.msra.mxu0 0.0
        %575 = vmatprep.subr.mxu0 0.0
        %576 = vmatpush1.msra.mxu0 0.0
        %577 = vmatprep.subr.mxu0 0.0
        %578 = vmatpush1.msra.mxu0 0.0
        %579 = vmatprep.mubr.f32.mxu0 0.0
        %580 = vmatmul.mubr.f32.gmra.mrb[0].mxu0 %v513
        %v581 = vpop.f32.mrb[0].mxu0
        %v582 = vadd.f32 %v511, %v581
        %v583 = vpop.f32.mrb[0].mxu0
        %584 = vdwg.mxu0
        %v585 = vmul.f32 %v582, 1.442695
        %v586 = vpow.pop %v585
        %v587 = vmul.f32 %v272, %v272
        %v588 = vsub.f32 1.0, %v587
        %v589 = vmul.f32 %v586, %v588
        %590 = vst [vmem:[%s268] sm:$0x1] %v589
        %s591 = sand.u32 %s183, 1
        %s592 = scalar_lea.sflag [#allocation4], %s591
        %s593 = sand.u32 %s183, 1
        %s594 = scalar_lea.vmem [#allocation3], %s593
        // Predicated region
        $region49: #{tpu_custom_call.1} parent=47 // pred_check
          %p595 = pneg %p193
        $region50: #{tpu_custom_call.1} parent=47 // pred_check_branch
          %597 = sbr.rel (%p595) target = $region52
        $region51: #{tpu_custom_call.1} parent=47 // pred_region
          %s599 = ssub.s32 16, 16
          %600 = vsyncadd %s592, %s599
          %s601 = smul.addr %s23, 16
          %s602 = scalar_lea.hbm %s7, %s601
          %s604 = sshll.u32 %s594, 4
          %s605 = int_to_ptr.vmem [resolvable:$true] %s604
          %607 = dma.vmem_to_hbm [thread:$0]  %s605, 16, %s602, %s592
        $region52: #{tpu_custom_call.1} parent=47 // pred_fallthru
          _
      $region48: #{tpu_custom_call.1} parent=5 // pred_fallthru
        _
      %p608 = scmp.le.s32.totalorder 2, %s18
      // Predicated region
      $region53: #{tpu_custom_call.1} parent=5 // pred_check
        %p609 = pneg %p608
      $region54: #{tpu_custom_call.1} parent=5 // pred_check_branch
        %611 = sbr.rel (%p609) target = $region56
      $region55: #{tpu_custom_call.1} parent=5 // pred_region
        %s612 = ssub.s32 %s18, 2
        // Predicated region
        $region57: #{tpu_custom_call.1} parent=55 // pred_check
          %p613 = pneg %p199
        $region58: #{tpu_custom_call.1} parent=55 // pred_check_branch
          %615 = sbr.rel (%p613) target = $region60
        $region59: #{tpu_custom_call.1} parent=55 // pred_region
          %s616 = sand.u32 %s184, 1
          %s617 = scalar_lea.sflag [#allocation4], %s616
          %s618 = sand.u32 %s184, 1
          %s619 = scalar_lea.vmem [#allocation3], %s618
          %620 = dma.done %s617, 16
        $region60: #{tpu_custom_call.1} parent=55 // pred_fallthru
          _
      $region56: #{tpu_custom_call.1} parent=5 // pred_fallthru
        _
    $region6: #{tpu_custom_call.1} parent=1 // loop_footer
      %s22 = sadd.s32 1, %s18
    $region7: #{tpu_custom_call.1} parent=1 // loop_footer_branch
      %17 = sbr.rel target = $region3
    $region8: #{tpu_custom_call.1} parent=1 // loop_exit
      _
    %621 = vsyncpa [#allocation4], 1
    %s622 = scalar_lea.sflag [#allocation4], 1
    %623 = vsyncpa %s622, 1

</llo_original>
